<compile_context>
chip_gen: v5e
topology: v5e:2x2
jax: 0.10.0
libtpu: 0.0.40
codegen_flags: <defaults>
</compile_context>

<pallas_src>
import numpy as np

import jax
import jax.numpy as jnp
from jax.experimental import pallas as pl
from jax.experimental.pallas import tpu as pltpu


def _round_up(v, m):
    return ((v + m - 1) // m) * m


def _choose_tiles(num_nodes, d_pad, cbytes, tm_target=512, tk_target=2048,
                  vmem_budget=40 * 1024 * 1024):
    """Pick (tm, n_row, tk, n_col).

    Keeps the double-buffered working set (A tile, Z tile, f32 init/out tiles) under
    `vmem_budget`, sized for v7x's 64 MiB physical VMEM (plenty of headroom on v5e/v6e).
    """
    n_col_full = _round_up(num_nodes, 128)
    n_row_full = _round_up(max(num_nodes, 1), 16)

    # tk (source/column tile): as large as possible, but keep the double-buffered
    # Z tile (tk, d_pad) under ~40% of the VMEM budget.
    tk = min(tk_target, n_col_full)
    z_cap = (int(0.4 * vmem_budget) // (2 * d_pad * cbytes)) // 128 * 128
    tk = max(128, min(tk, max(z_cap, 128)))
    n_col = _round_up(num_nodes, tk)

    # tm (target/row tile): want tm >= d_pad so the Z re-stream (~ A bytes * d_pad/tm) does
    # not dominate HBM traffic; capped by remaining VMEM (A double buffer + f32 init/out).
    # TODO(synk): for d_pad >= 2048 add a feature-dim grid axis instead of shrinking tm/tk.
    tm = max(tm_target, min(d_pad, 1024))
    per_row = 2 * tk * cbytes + 4 * d_pad * 4            # A (x2, compute) + init/out (x2 each, f32)
    remaining = max(vmem_budget - 2 * tk * d_pad * cbytes, per_row * 16)
    tm_cap = max(16, (remaining // per_row) // 16 * 16)
    tm = max(16, min(tm, tm_cap))
    if n_row_full <= tm:
        tm = n_row_full
    # When num_nodes > tm there are automatically >= 2 row tiles, so the "parallel" row axis
    # can still split across v7x's two TensorCores.
    n_row = _round_up(num_nodes, tm)
    return tm, n_row, tk, n_col


def _rgcn_block_kernel(flags_ref, rmap_ref, kmap_ref,      # scalar prefetch (SMEM)
                       a_ref, z_ref, init_ref, out_ref):
    """One grid step: out[i] (+)= A_r[i, k] @ Z_r[k], skipping all-zero adjacency tiles.

    flags/rmap/kmap : (R*KT,) int32 SMEM — per (r,k) tile activity and "repeat previous
                      active tile" block-index maps (drive the DMA-skip in the index_maps).
    a_ref    : (TM, TK)  adjacency tile of relation r (compute dtype)
    z_ref    : (TK, Dp)  pre-transformed features (X @ blockdiag(W_r)) tile
    init_ref : (TM, Dp)  f32 self-loop term  keep * (X @ blockdiag(W_self)), row tile
    out_ref  : (TM, Dp)  f32 accumulator, resident across the (r, k) reduction axes
    """
    r = pl.program_id(1)
    k = pl.program_id(2)
    j = r * pl.num_programs(2) + k

    @pl.when((r == 0) & (k == 0))
    def _():
        out_ref[...] = init_ref[...]

    @pl.when(flags_ref[j] != 0)
    def _():
        out_ref[...] += jnp.dot(a_ref[...], z_ref[...],
                                preferred_element_type=jnp.float32)


def block_decomposition_forward(x, blocks, node_keep_mask, source, target,
                                edge_type, edge_weights=None,
                                compute_dtype=jnp.bfloat16,
                                tm_target=512, tk_target=2048):
    """Forward pass of BlockDecomposition.

    x      : (num_nodes, input_dim)
    blocks : (num_relations + 1, num_blocks, block_size, block_size); last slot = self-loop.
    """
    num_rel_p1, num_blocks, block_size, _ = blocks.shape
    num_relations = num_rel_p1 - 1
    num_nodes, input_dim = x.shape
    assert num_blocks * block_size == input_dim

    x32 = x.astype(jnp.float32)
    w32 = blocks.astype(jnp.float32)

    # Z[r] = X @ blockdiag(W_r), all relations at once (one batched XLA matmul, no in-kernel
    # per-block (N,S)@(S,S) slicing / concatenate).
    xb = x32.reshape(num_nodes, num_blocks, block_size)
    z_all = jnp.einsum('nbi,rbij->rnbj', xb, w32).reshape(num_rel_p1, num_nodes, input_dim)

    # Self-loop relation: keep-mask scaled Z_self (VPU multiply, skips a dense N x N matmul).
    if node_keep_mask is None:
        keep = jnp.ones((num_nodes,), jnp.float32)
    else:
        keep = node_keep_mask.astype(jnp.float32)
    self_term = keep[:, None] * z_all[num_relations]           # (N, D) f32

    if num_relations == 0:
        return self_term

    cbytes = jnp.dtype(compute_dtype).itemsize
    d_pad = _round_up(input_dim, 128)
    tm, n_row, tk, n_col = _choose_tiles(num_nodes, d_pad, cbytes, tm_target, tk_target)
    kt = n_col // tk
    grid = (n_row // tm, num_relations, kt)

    # Dense bidirectional weighted adjacency per relation, built DIRECTLY in the compute dtype
    # (avoids an extra f32 R*N^2 HBM pass).  Self-edges (source == target) are counted twice,
    # matching the PyTorch reference's [s,t] + [t,s] concatenation.
    # TODO(synk): for realistic graphs (E << N^2) replace this dense adjacency with a
    # CSR/scalar-prefetch gather kernel so HBM traffic scales with num_edges, not R*N^2, and
    # cache/hoist the adjacency across calls for static graphs.
    # TODO(synk): on v7x an fp8(e4m3) adjacency (bf16 Z, f32 accum) would halve the A stream.
    if edge_weights is None:
        w_e = jnp.ones(source.shape, compute_dtype)
    else:
        w_e = edge_weights.astype(compute_dtype)
    adj = jnp.zeros((num_relations, n_row, n_col), compute_dtype)
    adj = adj.at[edge_type, target, source].add(w_e)
    adj = adj.at[edge_type, source, target].add(w_e)

    # Pad Z (source rows, feature lanes) and the self-loop initializer (target rows, lanes).
    z = jnp.zeros((num_relations, n_col, d_pad), compute_dtype)
    z = z.at[:, :num_nodes, :input_dim].set(z_all[:num_relations].astype(compute_dtype))

    init = jnp.zeros((n_row, d_pad), jnp.float32)
    init = init.at[:num_nodes, :input_dim].set(self_term)

    # ---- Tile-level sparsity metadata (scalar prefetch, lands in SMEM) ----------------------
    # flags[r*kt + k] == 1 iff adjacency tile column (r, k) can contain a nonzero entry
    # (some edge of relation r touches a node in column range k, in either direction).
    # rmap/kmap repeat the most recent active tile's block indices on inactive steps, so the
    # index_map returns an unchanged block index and Pallas skips the A/Z DMA entirely.
    src_t = (source // tk).astype(jnp.int32)
    tgt_t = (target // tk).astype(jnp.int32)
    et = edge_type.astype(jnp.int32)
    flags2d = jnp.zeros((num_relations, kt), jnp.int32)
    flags2d = flags2d.at[et, src_t].set(1)
    flags2d = flags2d.at[et, tgt_t].set(1)
    flags = flags2d.reshape(-1)
    steps = jnp.arange(num_relations * kt, dtype=jnp.int32)
    last_active = jax.lax.cummax(jnp.where(flags > 0, steps, -1), axis=0)
    first_active = jnp.argmax(flags > 0).astype(jnp.int32)          # 0 if no edges at all
    fetch = jnp.where(last_active >= 0, last_active, first_active)
    rmap = (fetch // kt).astype(jnp.int32)
    kmap = (fetch % kt).astype(jnp.int32)

    def a_map(i, r, k, flags_ref, rmap_ref, kmap_ref):
        j = r * kt + k
        return (rmap_ref[j], i, kmap_ref[j])

    def z_map(i, r, k, flags_ref, rmap_ref, kmap_ref):
        j = r * kt + k
        return (rmap_ref[j], kmap_ref[j], 0)

    def row_map(i, r, k, flags_ref, rmap_ref, kmap_ref):
        return (i, 0)

    # Double-buffered working set estimate -> explicit VMEM limit (v5e default is only 16 MiB;
    # cap at v7x's 64 MiB physical).
    vmem_bytes = 2 * tm * tk * cbytes + 2 * tk * d_pad * cbytes + 4 * tm * d_pad * 4
    vmem_limit = int(min(64 * 1024 * 1024, max(vmem_bytes + (8 << 20), 32 << 20)))

    cost = pl.CostEstimate(
        flops=int(2 * num_relations * n_row * n_col * d_pad),
        transcendentals=0,
        bytes_accessed=int(num_relations * n_row * n_col * cbytes                     # A
                           + num_relations * n_col * d_pad * cbytes * (n_row // tm)   # Z re-streams
                           + 2 * n_row * d_pad * 4),                                  # init + out
    )

    # TODO(synk): alias `init` with the output via input_output_aliases (saves one N x d_pad f32
    # HBM pass) once the alias-index convention w.r.t. scalar-prefetch operands is pinned down.
    out_pad = pl.pallas_call(
        _rgcn_block_kernel,
        out_shape=jax.ShapeDtypeStruct((n_row, d_pad), jnp.float32),
        grid_spec=pltpu.PrefetchScalarGridSpec(
            num_scalar_prefetch=3,
            grid=grid,
            in_specs=[
                # adjacency tile of relation r: (tm, tk) rows=targets, cols=sources
                pl.BlockSpec((None, tm, tk), a_map),
                # pre-transformed features of relation r: (tk, d_pad)
                pl.BlockSpec((None, tk, d_pad), z_map),
                # self-loop initializer: (tm, d_pad), resident across (r, k)
                pl.BlockSpec((tm, d_pad), row_map),
            ],
            out_specs=pl.BlockSpec((tm, d_pad), row_map),
        ),
        compiler_params=pltpu.CompilerParams(
            # row tiles independent -> megacore parallel on v7x; (r, k) are reduction axes.
            dimension_semantics=("parallel", "arbitrary", "arbitrary"),
            vmem_limit_bytes=vmem_limit,
        ),
        cost_estimate=cost,
    )(flags, rmap, kmap, adj, z, init)

    return out_pad[:num_nodes, :input_dim]


def _reference_forward(x, blocks, node_keep_mask, source, target, edge_type,
                       edge_weights):
    """NumPy mirror of the PyTorch forward (gather / unique / index_add semantics)."""
    x = np.asarray(x, np.float32)
    blocks = np.asarray(blocks, np.float32)
    num_nodes, D = x.shape
    R = blocks.shape[0] - 1
    B, S = blocks.shape[1], blocks.shape[2]
    xb = x.reshape(num_nodes, B, S)
    out = np.zeros_like(xb)
    m_self = np.einsum('nbi,bij->nbj', xb, blocks[-1])
    if node_keep_mask is not None:
        km = np.asarray(node_keep_mask, bool)
        out[km] = m_self[km]
    else:
        out = m_self
    source = np.asarray(source)
    target = np.asarray(target)
    edge_type = np.asarray(edge_type)
    ew = None if edge_weights is None else np.asarray(edge_weights, np.float32)
    for r in range(R):
        mask = edge_type == r
        if not mask.any():
            continue
        s_r, t_r = source[mask], target[mask]
        w_r = None if ew is None else ew[mask]
        s2 = np.concatenate([s_r, t_r])
        t2 = np.concatenate([t_r, s_r])
        m = np.einsum('nbi,bij->nbj', xb[s2], blocks[r])
        if w_r is not None:
            m = m * np.concatenate([w_r, w_r])[:, None, None]
        np.add.at(out, t2, m)
    return out.reshape(num_nodes, D)


if __name__ == "__main__":
    # --- small, deterministic problem ---------------------------------------------------------
    num_nodes = 24
    input_dim = 32
    num_blocks = 4
    block_size = input_dim // num_blocks
    num_relations = 3
    num_edges = 40

    key = jax.random.PRNGKey(0)
    k_x, k_w, k_s, k_t, k_r, k_ew, k_m = jax.random.split(key, 7)

    x = jax.random.normal(k_x, (num_nodes, input_dim), jnp.float32)
    # parameter init like reset_parameters(): normal with std = sqrt(2) / (2 * block_size)
    std = float(np.sqrt(2.0) / (2 * block_size))
    blocks = std * jax.random.normal(
        k_w, (num_relations + 1, num_blocks, block_size, block_size), jnp.float32)

    source = jax.random.randint(k_s, (num_edges,), 0, num_nodes, jnp.int32)
    target = jax.random.randint(k_t, (num_edges,), 0, num_nodes, jnp.int32)
    edge_type = jax.random.randint(k_r, (num_edges,), 0, num_relations, jnp.int32)
    edge_weights = jax.random.uniform(k_ew, (num_edges,), jnp.float32, 0.1, 1.0)
    node_keep_mask = jax.random.bernoulli(k_m, 0.8, (num_nodes,))

    ref = _reference_forward(x, blocks, node_keep_mask, source, target,
                             edge_type, edge_weights)

    # f32 compute path: tight correctness check.
    out_f32 = block_decomposition_forward(
        x, blocks, node_keep_mask, source, target, edge_type, edge_weights,
        compute_dtype=jnp.float32)
    out_f32 = jax.block_until_ready(out_f32)
    np.testing.assert_allclose(np.asarray(out_f32), ref, rtol=1e-4, atol=1e-5)

    # bf16 compute path (default, HBM-traffic-optimized): loose check (f32 accumulation).
    out_bf16 = block_decomposition_forward(
        x, blocks, node_keep_mask, source, target, edge_type, edge_weights)
    out_bf16 = jax.block_until_ready(out_bf16)
    np.testing.assert_allclose(np.asarray(out_bf16), ref, rtol=5e-2, atol=5e-2)

    # no-mask / no-weight branches.
    ref_nm = _reference_forward(x, blocks, None, source, target, edge_type, None)
    out_nm = block_decomposition_forward(
        x, blocks, None, source, target, edge_type, None,
        compute_dtype=jnp.float32)
    out_nm = jax.block_until_ready(out_nm)
    np.testing.assert_allclose(np.asarray(out_nm), ref_nm, rtol=1e-4, atol=1e-5)

    # --- multi-tile + tile-skip exercise: several row/col tiles, empty relations -------------
    n2 = 300
    r2 = 4
    e2 = 60
    k_x2, k_w2, k_s2, k_t2, k_r2 = jax.random.split(jax.random.PRNGKey(1), 5)
    x2 = jax.random.normal(k_x2, (n2, input_dim), jnp.float32)
    blocks2 = std * jax.random.normal(
        k_w2, (r2 + 1, num_blocks, block_size, block_size), jnp.float32)
    # edges concentrated in the first 100 nodes and only relations {0, 1}: relations 2, 3 and
    # most (r, k) adjacency tile columns are all-zero -> exercises the DMA-skip path.
    source2 = jax.random.randint(k_s2, (e2,), 0, 100, jnp.int32)
    target2 = jax.random.randint(k_t2, (e2,), 0, 100, jnp.int32)
    edge_type2 = jax.random.randint(k_r2, (e2,), 0, 2, jnp.int32)

    ref2 = _reference_forward(x2, blocks2, None, source2, target2, edge_type2, None)
    out2 = block_decomposition_forward(
        x2, blocks2, None, source2, target2, edge_type2, None,
        compute_dtype=jnp.float32, tm_target=128, tk_target=128)
    out2 = jax.block_until_ready(out2)
    np.testing.assert_allclose(np.asarray(out2), ref2, rtol=1e-4, atol=1e-5)

    print("KERNEL_OK")
</pallas_src>

<mosaic_0001>
module attributes {stable_mosaic.version = 11 : i64} {
  func.func @_rgcn_block_kernel(%arg0: i32, %arg1: i32, %arg2: i32, %arg3: memref<3xi32, #tpu.memory_space<smem>>, %arg4: memref<3xi32, #tpu.memory_space<smem>>, %arg5: memref<3xi32, #tpu.memory_space<smem>>, %arg6: memref<1x32x128xf32, #tpu.memory_space<vmem>>, %arg7: memref<1x128x128xf32, #tpu.memory_space<vmem>>, %arg8: memref<32x128xf32, #tpu.memory_space<vmem>>, %arg9: memref<32x128xf32, #tpu.memory_space<vmem>>) attributes {dimension_semantics = [#tpu.dimension_semantics<parallel>, #tpu.dimension_semantics<arbitrary>, #tpu.dimension_semantics<arbitrary>], iteration_bounds = array<i64: 1, 3, 1>, scalar_prefetch = 3 : i64, scratch_operands = 0 : i64, tpu.core_type = #tpu.core_type<tc>, window_params = [{transform_indices = @transform_0, window_bounds = array<i64: 1, 32, 128>}, {transform_indices = @transform_1, window_bounds = array<i64: 1, 128, 128>}, {transform_indices = @transform_2, window_bounds = array<i64: 32, 128>}, {transform_indices = @transform_3, window_bounds = array<i64: 32, 128>}]} {
    %c1_i32 = arith.constant 1 : i32
    %0 = arith.muli %arg1, %c1_i32 : i32
    %1 = arith.addi %0, %arg2 : i32
    %c0_i32 = arith.constant 0 : i32
    %2 = arith.cmpi eq, %arg1, %c0_i32 : i32
    %c0_i32_0 = arith.constant 0 : i32
    %3 = arith.cmpi eq, %arg2, %c0_i32_0 : i32
    %4 = arith.andi %2, %3 : i1
    %5 = arith.extui %4 : i1 to i32
    %c0_i32_1 = arith.constant 0 : i32
    %6 = arith.cmpi ne, %5, %c0_i32_1 : i32
    scf.if %6 {
      %c0 = arith.constant 0 : index
      %c0_4 = arith.constant 0 : index
      %12 = vector.load %arg8[%c0, %c0_4] : memref<32x128xf32, #tpu.memory_space<vmem>>, vector<32x128xf32>
      %c0_5 = arith.constant 0 : index
      %c0_6 = arith.constant 0 : index
      %13 = vector.load %arg9[%c0_5, %c0_6] : memref<32x128xf32, #tpu.memory_space<vmem>>, vector<32x128xf32>
      tpu.vector_store %arg9[%c0_5, %c0_6], %12 {strides = array<i32>} : memref<32x128xf32, #tpu.memory_space<vmem>>, vector<32x128xf32>,
    } else {
    }
    %7 = arith.index_cast %1 : i32 to index
    %8 = memref.load %arg3[%7] : memref<3xi32, #tpu.memory_space<smem>>
    %c0_i32_2 = arith.constant 0 : i32
    %9 = arith.cmpi ne, %8, %c0_i32_2 : i32
    %10 = arith.extui %9 : i1 to i32
    %c0_i32_3 = arith.constant 0 : i32
    %11 = arith.cmpi ne, %10, %c0_i32_3 : i32
    scf.if %11 {
      %c0 = arith.constant 0 : index
      %c0_4 = arith.constant 0 : index
      %12 = vector.load %arg9[%c0, %c0_4] : memref<32x128xf32, #tpu.memory_space<vmem>>, vector<32x128xf32>
      %c0_5 = arith.constant 0 : index
      %c0_6 = arith.constant 0 : index
      %c0_7 = arith.constant 0 : index
      %13 = vector.load %arg6[%c0_5, %c0_6, %c0_7] : memref<1x32x128xf32, #tpu.memory_space<vmem>>, vector<1x32x128xf32>
      %14 = vector.shape_cast %13 : vector<1x32x128xf32> to vector<32x128xf32>
      %c0_8 = arith.constant 0 : index
      %c0_9 = arith.constant 0 : index
      %c0_10 = arith.constant 0 : index
      %15 = vector.load %arg7[%c0_8, %c0_9, %c0_10] : memref<1x128x128xf32, #tpu.memory_space<vmem>>, vector<1x128x128xf32>
      %16 = vector.shape_cast %15 : vector<1x128x128xf32> to vector<128x128xf32>
      %cst = arith.constant dense<0.000000e+00> : vector<32x128xf32>
      %17 = tpu.matmul %14, %16, %cst {dimension_numbers = #tpu.dot_dimension_numbers<[1], [0], [0], [1], [0, 0, 1, 1], [], []>} : vector<32x128xf32>, vector<128x128xf32>, vector<32x128xf32> -> vector<32x128xf32>
      %18 = arith.addf %12, %17 : vector<32x128xf32>
      %c0_11 = arith.constant 0 : index
      %c0_12 = arith.constant 0 : index
      %19 = vector.load %arg9[%c0_11, %c0_12] : memref<32x128xf32, #tpu.memory_space<vmem>>, vector<32x128xf32>
      tpu.vector_store %arg9[%c0_11, %c0_12], %18 {strides = array<i32>} : memref<32x128xf32, #tpu.memory_space<vmem>>, vector<32x128xf32>,
    } else {
    }
    return
  }
  func.func @transform_0(%arg0: i32, %arg1: i32, %arg2: i32, %arg3: memref<3xi32, #tpu.memory_space<smem>>, %arg4: memref<3xi32, #tpu.memory_space<smem>>, %arg5: memref<3xi32, #tpu.memory_space<smem>>) -> (i32, i32, i32) {
    %c1_i32 = arith.constant 1 : i32
    %0 = arith.muli %arg1, %c1_i32 : i32
    %1 = arith.addi %0, %arg2 : i32
    %2 = arith.index_cast %1 : i32 to index
    %3 = memref.load %arg4[%2] : memref<3xi32, #tpu.memory_space<smem>>
    %4 = arith.index_cast %1 : i32 to index
    %5 = memref.load %arg5[%4] : memref<3xi32, #tpu.memory_space<smem>>
    %c0_i32 = arith.constant 0 : i32
    return %3, %arg0, %5 : i32, i32, i32
  }
  func.func @transform_1(%arg0: i32, %arg1: i32, %arg2: i32, %arg3: memref<3xi32, #tpu.memory_space<smem>>, %arg4: memref<3xi32, #tpu.memory_space<smem>>, %arg5: memref<3xi32, #tpu.memory_space<smem>>) -> (i32, i32, i32) {
    %c1_i32 = arith.constant 1 : i32
    %0 = arith.muli %arg1, %c1_i32 : i32
    %1 = arith.addi %0, %arg2 : i32
    %2 = arith.index_cast %1 : i32 to index
    %3 = memref.load %arg4[%2] : memref<3xi32, #tpu.memory_space<smem>>
    %4 = arith.index_cast %1 : i32 to index
    %5 = memref.load %arg5[%4] : memref<3xi32, #tpu.memory_space<smem>>
    %c0_i32 = arith.constant 0 : i32
    %c0_i32_0 = arith.constant 0 : i32
    return %3, %5, %c0_i32 : i32, i32, i32
  }
  func.func @transform_2(%arg0: i32, %arg1: i32, %arg2: i32, %arg3: memref<3xi32, #tpu.memory_space<smem>>, %arg4: memref<3xi32, #tpu.memory_space<smem>>, %arg5: memref<3xi32, #tpu.memory_space<smem>>) -> (i32, i32) {
    %c0_i32 = arith.constant 0 : i32
    %c0_i32_0 = arith.constant 0 : i32
    return %arg0, %c0_i32 : i32, i32
  }
  func.func @transform_3(%arg0: i32, %arg1: i32, %arg2: i32, %arg3: memref<3xi32, #tpu.memory_space<smem>>, %arg4: memref<3xi32, #tpu.memory_space<smem>>, %arg5: memref<3xi32, #tpu.memory_space<smem>>) -> (i32, i32) {
    %c0_i32 = arith.constant 0 : i32
    %c0_i32_0 = arith.constant 0 : i32
    return %arg0, %c0_i32 : i32, i32
  }
}

</mosaic_0001>

<llo_original>
// kernel: tpu_custom_call.1
$region0: #{tpu_custom_call.1}
  #allocation0 [shape = 'u32[]', space=smem, size = 0x4, offset = 0x4, fixed_abs, tag = 'smem constant byte address 0x4 - core index']
  #allocation1 [shape = 'u32[72,128]{1,0:T(1,128)}', space=vmem, size = 0x9000, scoped, tag = 'internal scratch']
  #allocation2 [shape = 's32[1]{0}', space=sflag, size = 0x4, scoped, tag = 'scoped memory for tpu_custom_call.1']
  #allocation3 [shape = 'u8[512]{0}', space=smem, size = 0x200, scoped, tag = 'prefetched SMEM operand 0']
  #allocation4 [shape = 'u8[512]{0}', space=smem, size = 0x200, scoped, tag = 'prefetched SMEM operand 1']
  #allocation5 [shape = 'u8[512]{0}', space=smem, size = 0x200, scoped, tag = 'prefetched SMEM operand 2']
  %s0 = inlined_call_operand.hbm [shape: s32[3], index: 0, kind: input, shape index: {}]
  %s1 = inlined_call_operand.hbm [shape: s32[3], index: 1, kind: input, shape index: {}]
  %s2 = inlined_call_operand.vmem [shape: s32[3], index: 2, kind: input, shape index: {}]
  %s3 = inlined_call_operand.hbm [shape: f32[3,32,128], index: 3, kind: input, shape index: {}]
  %s4 = inlined_call_operand.hbm [shape: f32[3,128,128], index: 4, kind: input, shape index: {}]
  %s5 = inlined_call_operand.hbm [shape: f32[32,128], index: 5, kind: input, shape index: {}]
  %s6 = inlined_call_operand.hbm [shape: f32[32,128], index: 6, kind: output, shape index: {}]
  %s7 = sld [smem:[#allocation0]]
  $region65: #{tpu_custom_call.1} parent=0
    _
  %s9 = ssub.s32 1, %s7
  %s10 = scalar_select 0, %s9, %s7
  %s12 = sshll.u32 %s0, 4
  %s13 = int_to_ptr.hbm [resolvable:$true] %s12
  %15 = dma.hbm_to_smem %s13, 16, [#allocation3], [#allocation2]
  %s17 = sshll.u32 %s1, 4
  %s18 = int_to_ptr.hbm [resolvable:$true] %s17
  %20 = dma.hbm_to_smem %s18, 16, [#allocation4], [#allocation2]
  %s22 = sshll.u32 %s2, 4
  %s23 = int_to_ptr.vmem [resolvable:$true] %s22
  %25 = dma.vmem_to_smem %s23, 16, [#allocation5], [#allocation2]
  %27 = dma.done [#allocation2], 48
  %28 = sfence
  $region1: #{tpu_custom_call.1} parent=0
    #allocation6 [shape = 'u8[32768]{0}', space=vmem, size = 0x8000, scoped, tag = 'input window, operand 3']
    #allocation7 [shape = 's32[2]{0}', space=sflag, size = 0x8, scoped, tag = 'scoped memory for tpu_custom_call.1']
    #allocation8 [shape = 's32[2]{0}', space=sflag, size = 0x8, scoped, tag = 'scoped memory for tpu_custom_call.1']
    #allocation9 [shape = 'u8[131072]{0}', space=vmem, size = 0x20000, scoped, tag = 'input window, operand 4']
    #allocation10 [shape = 's32[2]{0}', space=sflag, size = 0x8, scoped, tag = 'scoped memory for tpu_custom_call.1']
    #allocation11 [shape = 'u8[16384]{0}', space=vmem, size = 0x4000, scoped, tag = 'input window, operand 5, single buffered']
    #allocation12 [shape = 'u8[16384]{0}', space=vmem, size = 0x4000, scoped, tag = 'output window, operand 0, single buffered']
    %29 = vsyncpa [#allocation7], 0
    %s30 = scalar_lea.sflag [#allocation7], 1
    %31 = vsyncpa %s30, 0
    %32 = vsyncpa [#allocation10], 0
    %s33 = scalar_lea.sflag [#allocation10], 1
    %34 = vsyncpa %s33, 0
    %35 = vsyncpa [#allocation8], 0
    loop: start=0, step=1, limit=5
    $region2: #{tpu_custom_call.1} parent=1 // loop_pre_header
      _
    $region3: #{tpu_custom_call.1} parent=1 // loop_header
      %s37 = sphi 0, %s41
      %p38 = scmp.ge.s32.totalorder %s37, 5
      %s44 = sphi 0, %s63
      %s45 = sphi 0, %s59
      %s46 = sphi 0, %s55
      %s47 = sphi 0, %s44
      %s48 = sphi 0, %s45
      %s49 = sphi 0, %s46
      %s50 = sphi 0, %s47
      %s51 = sphi 0, %s48
      %s52 = sphi 0, %s49
      %s76 = sphi 0, %s78
      %s79 = sphi 0, %s76
      %s80 = sphi 0, %s79
      %s96 = sphi 0, %s80
      %s110 = sphi 0, %s112
      %s113 = sphi 0, %s110
      %s114 = sphi 0, %s113
      %s130 = sphi 0, %s114
      %s136 = sphi 0, %s138
      %s139 = sphi 0, %s136
      %s140 = sphi 0, %s139
      %s156 = sphi 0, %s140
      %s162 = sphi 0, %s164
      %s165 = sphi 0, %s162
      %s166 = sphi 0, %s165
      %s182 = sphi 0, %s166
    $region4: #{tpu_custom_call.1} parent=1 // loop_header_branch
      %40 = sbr.rel (%p38) target = $region8
    $region5: #{tpu_custom_call.1} parent=1 // loop_body
      %s42 = ssub.s32 %s37, 1
      %s43 = ssub.s32 %s37, 2
      %s53 = sadd.s32 1, %s46
      %p54 = scmp.ge.s32.totalorder %s53, 1
      %s55 = scalar_select %p54, 0, %s53
      %s56 = sadd.s32 1, %s45
      %s57 = scalar_select %p54, %s56, %s45
      %p58 = scmp.ge.s32.totalorder %s57, 3
      %s59 = scalar_select %p58, 0, %s57
      %s60 = sadd.s32 1, %s44
      %s61 = scalar_select %p58, %s60, %s44
      %p62 = scmp.ge.s32.totalorder %s61, 1
      %s63 = scalar_select %p62, 0, %s61
      %s64 = sadd.s32 %s45, %s46
      %s65 = sld [smem:[#allocation4 + %s64]]
      %s66 = sld [smem:[#allocation5 + %s64]]
      %s67 = sadd.s32 %s59, %s55
      %s68 = sld [smem:[#allocation4 + %s67]]
      %s69 = sld [smem:[#allocation5 + %s67]]
      %s70 = ssub.s32 %s65, %s68
      %s71 = ssub.s32 %s44, %s63
      %s72 = sor.u32 %s70, %s71
      %s73 = ssub.s32 %s66, %s69
      %s74 = sor.u32 %s72, %s73
      %p75 = scmp.eq.s32.totalorder %s74, 0
      %s77 = sadd.s32 %s76, 1
      %s78 = scalar_select %p75, %s76, %s77
      %p81 = pneg %p75
      %p82 = scmp.eq.s32.totalorder %s37, 2
      %p83 = por %p81, %p82
      %p84 = scmp.ne.s32.totalorder %s76, %s79
      %p85 = scmp.eq.s32.totalorder %s37, 0
      %p86 = por %p84, %p85
      %p87 = scmp.ne.s32.totalorder %s76, %s79
      %p88 = scmp.eq.s32.totalorder %s42, 2
      %p89 = por %p87, %p88
      %p90 = scmp.ne.s32.totalorder %s79, %s80
      %p91 = scmp.eq.s32.totalorder %s42, 0
      %p92 = por %p90, %p91
      %p93 = scmp.ne.s32.totalorder %s79, %s80
      %p94 = scmp.eq.s32.totalorder %s43, 2
      %p95 = por %p93, %p94
      %p97 = scmp.ne.s32.totalorder %s80, %s96
      %p98 = scmp.eq.s32.totalorder %s43, 0
      %p99 = por %p97, %p98
      %s100 = sadd.s32 %s45, %s46
      %s101 = sld [smem:[#allocation4 + %s100]]
      %s102 = sld [smem:[#allocation5 + %s100]]
      %s103 = sadd.s32 %s59, %s55
      %s104 = sld [smem:[#allocation4 + %s103]]
      %s105 = sld [smem:[#allocation5 + %s103]]
      %s106 = ssub.s32 %s101, %s104
      %s107 = ssub.s32 %s102, %s105
      %s108 = sor.u32 %s106, %s107
      %p109 = scmp.eq.s32.totalorder %s108, 0
      %s111 = sadd.s32 %s110, 1
      %s112 = scalar_select %p109, %s110, %s111
      %p115 = pneg %p109
      %p116 = scmp.eq.s32.totalorder %s37, 2
      %p117 = por %p115, %p116
      %p118 = scmp.ne.s32.totalorder %s110, %s113
      %p119 = scmp.eq.s32.totalorder %s37, 0
      %p120 = por %p118, %p119
      %p121 = scmp.ne.s32.totalorder %s110, %s113
      %p122 = scmp.eq.s32.totalorder %s42, 2
      %p123 = por %p121, %p122
      %p124 = scmp.ne.s32.totalorder %s113, %s114
      %p125 = scmp.eq.s32.totalorder %s42, 0
      %p126 = por %p124, %p125
      %p127 = scmp.ne.s32.totalorder %s113, %s114
      %p128 = scmp.eq.s32.totalorder %s43, 2
      %p129 = por %p127, %p128
      %p131 = scmp.ne.s32.totalorder %s114, %s130
      %p132 = scmp.eq.s32.totalorder %s43, 0
      %p133 = por %p131, %p132
      %s134 = ssub.s32 %s44, %s63
      %p135 = scmp.eq.s32.totalorder %s134, 0
      %s137 = sadd.s32 %s136, 1
      %s138 = scalar_select %p135, %s136, %s137
      %p141 = pneg %p135
      %p142 = scmp.eq.s32.totalorder %s37, 2
      %p143 = por %p141, %p142
      %p144 = scmp.ne.s32.totalorder %s136, %s139
      %p145 = scmp.eq.s32.totalorder %s37, 0
      %p146 = por %p144, %p145
      %p147 = scmp.ne.s32.totalorder %s136, %s139
      %p148 = scmp.eq.s32.totalorder %s42, 2
      %p149 = por %p147, %p148
      %p150 = scmp.ne.s32.totalorder %s139, %s140
      %p151 = scmp.eq.s32.totalorder %s42, 0
      %p152 = por %p150, %p151
      %p153 = scmp.ne.s32.totalorder %s139, %s140
      %p154 = scmp.eq.s32.totalorder %s43, 2
      %p155 = por %p153, %p154
      %p157 = scmp.ne.s32.totalorder %s140, %s156
      %p158 = scmp.eq.s32.totalorder %s43, 0
      %p159 = por %p157, %p158
      %s160 = ssub.s32 %s44, %s63
      %p161 = scmp.eq.s32.totalorder %s160, 0
      %s163 = sadd.s32 %s162, 1
      %s164 = scalar_select %p161, %s162, %s163
      %p167 = pneg %p161
      %p168 = scmp.eq.s32.totalorder %s37, 2
      %p169 = por %p167, %p168
      %p170 = scmp.ne.s32.totalorder %s162, %s165
      %p171 = scmp.eq.s32.totalorder %s37, 0
      %p172 = por %p170, %p171
      %p173 = scmp.ne.s32.totalorder %s162, %s165
      %p174 = scmp.eq.s32.totalorder %s42, 2
      %p175 = por %p173, %p174
      %p176 = scmp.ne.s32.totalorder %s165, %s166
      %p177 = scmp.eq.s32.totalorder %s42, 0
      %p178 = por %p176, %p177
      %p179 = scmp.ne.s32.totalorder %s165, %s166
      %p180 = scmp.eq.s32.totalorder %s43, 2
      %p181 = por %p179, %p180
      %p183 = scmp.ne.s32.totalorder %s166, %s182
      %p184 = scmp.eq.s32.totalorder %s43, 0
      %p185 = por %p183, %p184
      %p186 = scmp.le.s32.totalorder 1, %s37
      %p187 = scmp.lt.s32.totalorder %s37, 4
      %p188 = pnand %p186, %p187
      %p189 = pneg %p188
      // Predicated region
      $region9: #{tpu_custom_call.1} parent=5 // pred_check
        _
      $region10: #{tpu_custom_call.1} parent=5 // pred_check_branch
        %191 = sbr.rel (%p188) target = $region12
      $region11: #{tpu_custom_call.1} parent=5 // pred_region
        %s192 = ssub.s32 %s37, 1
        // Predicated region
        $region13: #{tpu_custom_call.1} parent=11 // pred_check
          %p193 = pneg %p152
        $region14: #{tpu_custom_call.1} parent=11 // pred_check_branch
          %195 = sbr.rel (%p193) target = $region16
        $region15: #{tpu_custom_call.1} parent=11 // pred_region
          %s196 = smul.u32 4, %s47
          %198 = vsyncadd [#allocation10], 0
          %s199 = smul.addr %s196, 8
          %s200 = scalar_lea.hbm %s5, %s199
          %s201 = sshll.u32 %s200, 4
          %s202 = int_to_ptr.hbm [resolvable:$true] %s201
          %s203 = sshll.u32 [#allocation11], 4
          %s204 = int_to_ptr.vmem [resolvable:$true] %s203
          %209 = dma.hbm_to_vmem [thread:$0]  %s202, 512, %s204, [#allocation10], 128, 128, 8
        $region16: #{tpu_custom_call.1} parent=11 // pred_fallthru
          _
      $region12: #{tpu_custom_call.1} parent=5 // pred_fallthru
        _
      %p210 = scmp.lt.s32.totalorder %s37, 3
      // Predicated region
      $region17: #{tpu_custom_call.1} parent=5 // pred_check
        %p211 = pneg %p210
      $region18: #{tpu_custom_call.1} parent=5 // pred_check_branch
        %213 = sbr.rel (%p211) target = $region20
      $region19: #{tpu_custom_call.1} parent=5 // pred_region
        // Predicated region
        $region21: #{tpu_custom_call.1} parent=19 // pred_check
          %p214 = pneg %p86
        $region22: #{tpu_custom_call.1} parent=19 // pred_check_branch
          %216 = sbr.rel (%p214) target = $region24
        $region23: #{tpu_custom_call.1} parent=19 // pred_region
          %s217 = sand.u32 %s76, 1
          %s218 = scalar_lea.sflag [#allocation7], %s217
          %s219 = sand.u32 %s76, 1
          %s220 = smul.addr %s219, 32
          %s221 = scalar_lea.vmem [#allocation6], %s220
          %s222 = sadd.s32 %s45, %s46
          %s223 = sld [smem:[#allocation4 + %s222]]
          %s224 = sld [smem:[#allocation5 + %s222]]
          %s225 = smul.u32 4, %s44
          %227 = vsyncadd %s218, 0
          %s228 = sadd.s32 %s224, %s225
          %s229 = smul.addr %s223, 4
          %s230 = sadd.s32 %s228, %s229
          %s231 = smul.addr %s230, 8
          %s232 = scalar_lea.hbm %s3, %s231
          %s233 = sshll.u32 %s232, 4
          %s234 = int_to_ptr.hbm [resolvable:$true] %s233
          %s235 = sshll.u32 %s221, 4
          %s236 = int_to_ptr.vmem [resolvable:$true] %s235
          %241 = dma.hbm_to_vmem [thread:$0]  %s234, 512, %s236, %s218, 128, 128, 8
        $region24: #{tpu_custom_call.1} parent=19 // pred_fallthru
          _
        // Predicated region
        $region25: #{tpu_custom_call.1} parent=19 // pred_check
          %p242 = pneg %p120
        $region26: #{tpu_custom_call.1} parent=19 // pred_check_branch
          %244 = sbr.rel (%p242) target = $region28
        $region27: #{tpu_custom_call.1} parent=19 // pred_region
          %s245 = sand.u32 %s37, 1
          %s246 = scalar_lea.sflag [#allocation10], %s245
          %s247 = sand.u32 %s110, 1
          %s248 = smul.addr %s247, 128
          %s249 = scalar_lea.vmem [#allocation9], %s248
          %s250 = sadd.s32 %s45, %s46
          %s251 = sld [smem:[#allocation4 + %s250]]
          %s252 = sld [smem:[#allocation5 + %s250]]
          %s253 = smul.u32 16, %s252
          %255 = vsyncadd %s246, 0
          %s256 = smul.addr %s251, 16
          %s257 = sadd.s32 %s253, %s256
          %s258 = smul.addr %s257, 8
          %s259 = scalar_lea.hbm %s4, %s258
          %s260 = sshll.u32 %s259, 4
          %s261 = int_to_ptr.hbm [resolvable:$true] %s260
          %s262 = sshll.u32 %s249, 4
          %s263 = int_to_ptr.vmem [resolvable:$true] %s262
          %268 = dma.hbm_to_vmem [thread:$0]  %s261, 2048, %s263, %s246, 128, 128, 8
        $region28: #{tpu_custom_call.1} parent=19 // pred_fallthru
          _
      $region20: #{tpu_custom_call.1} parent=5 // pred_fallthru
        _
      %p269 = scmp.le.s32.totalorder 1, %s37
      %p270 = scmp.lt.s32.totalorder %s37, 4
      %p271 = pnand %p269, %p270
      %p272 = pneg %p271
      // Predicated region
      $region29: #{tpu_custom_call.1} parent=5 // pred_check
        _
      $region30: #{tpu_custom_call.1} parent=5 // pred_check_branch
        %274 = sbr.rel (%p271) target = $region32
      $region31: #{tpu_custom_call.1} parent=5 // pred_region
        %s275 = ssub.s32 %s37, 1
        %s276 = sand.u32 %s79, 1
        %s277 = scalar_lea.sflag [#allocation7], %s276
        %s278 = sand.u32 %s79, 1
        %s279 = smul.addr %s278, 32
        %s280 = scalar_lea.vmem [#allocation6], %s279
        // Predicated region
        $region33: #{tpu_custom_call.1} parent=31 // pred_check
          %p281 = pneg %p92
        $region34: #{tpu_custom_call.1} parent=31 // pred_check_branch
          %283 = sbr.rel (%p281) target = $region36
        $region35: #{tpu_custom_call.1} parent=31 // pred_region
          %285 = dma.done %s277, 512
        $region36: #{tpu_custom_call.1} parent=31 // pred_fallthru
          _
        %s286 = sand.u32 %s42, 1
        %s287 = scalar_lea.sflag [#allocation10], %s286
        %s288 = sand.u32 %s113, 1
        %s289 = smul.addr %s288, 128
        %s290 = scalar_lea.vmem [#allocation9], %s289
        // Predicated region
        $region37: #{tpu_custom_call.1} parent=31 // pred_check
          %p291 = pneg %p126
        $region38: #{tpu_custom_call.1} parent=31 // pred_check_branch
          %293 = sbr.rel (%p291) target = $region40
        $region39: #{tpu_custom_call.1} parent=31 // pred_region
          %295 = dma.done %s287, 2048
        $region40: #{tpu_custom_call.1} parent=31 // pred_fallthru
          _
        // Predicated region
        $region41: #{tpu_custom_call.1} parent=31 // pred_check
          %p296 = pneg %p152
        $region42: #{tpu_custom_call.1} parent=31 // pred_check_branch
          %298 = sbr.rel (%p296) target = $region44
        $region43: #{tpu_custom_call.1} parent=31 // pred_region
          %300 = dma.done [#allocation10], 512
        $region44: #{tpu_custom_call.1} parent=31 // pred_fallthru
          _
        %s301 = sand.u32 %s79, 1
        %s302 = scalar_lea.sflag [#allocation7], %s301
        %s303 = sand.u32 %s79, 1
        %s304 = smul.addr %s303, 32
        %s305 = scalar_lea.vmem [#allocation6], %s304
        %p306 = pneg %p92
        %p307 = pneg %p89
        %s308 = sand.u32 %s42, 1
        %s309 = scalar_lea.sflag [#allocation10], %s308
        %s310 = sand.u32 %s113, 1
        %s311 = smul.addr %s310, 128
        %s312 = scalar_lea.vmem [#allocation9], %s311
        %p313 = pneg %p126
        %p314 = pneg %p123
        %p315 = pneg %p152
        %p316 = pneg %p149
        %p317 = pneg %p178
        %p318 = pneg %p175
        %s319 = sadd.s32 %s48, %s49
        %s320 = sld [smem:[#allocation4 + %s319]]
        %s321 = sld [smem:[#allocation5 + %s319]]
        %s322 = smul.u32 4, %s47
        %s323 = sadd.s32 %s48, %s49
        %s324 = sld [smem:[#allocation4 + %s323]]
        %s325 = sld [smem:[#allocation5 + %s323]]
        %s326 = smul.u32 16, %s325
        %s327 = smul.u32 4, %s47
        %s328 = smul.u32 4, %s47
        %s329 = sadd.s32 %s48, %s49
        %p330 = scmp.eq.s32.totalorder %s48, 0
        %p331 = scmp.eq.s32.totalorder %s49, 0
        %p332 = pnand %p330, %p331
        %p333 = pneg %p332
        // Predicated region
        $region45: #{tpu_custom_call.1} parent=31 // pred_check
          _
        $region46: #{tpu_custom_call.1} parent=31 // pred_check_branch
          %335 = sbr.rel (%p332) target = $region48
        $region47: #{tpu_custom_call.1} parent=31 // pred_region
          %v336 = vld [vmem:[#allocation11] sm:$0xff]
          %v337 = vld [vmem:[#allocation11 + $0x8] sm:$0xff]
          %v338 = vld [vmem:[#allocation11 + $0x10] sm:$0xff]
          %v339 = vld [vmem:[#allocation11 + $0x18] sm:$0xff]
          %340 = vst [vmem:[#allocation12] sm:$0xff] %v336
          %341 = vst [vmem:[#allocation12 + $0x8] sm:$0xff] %v337
          %342 = vst [vmem:[#allocation12 + $0x10] sm:$0xff] %v338
          %343 = vst [vmem:[#allocation12 + $0x18] sm:$0xff] %v339
        $region48: #{tpu_custom_call.1} parent=31 // pred_fallthru
          _
        %s344 = sld [smem:[#allocation3 + %s329]]
        %p345 = scmp.ne.s32.totalorder %s344, 0
        // Predicated region
        $region49: #{tpu_custom_call.1} parent=31 // pred_check
          %p346 = pneg %p345
        $region50: #{tpu_custom_call.1} parent=31 // pred_check_branch
          %348 = sbr.rel (%p346) target = $region52
        $region51: #{tpu_custom_call.1} parent=31 // pred_region
          %v349 = vld [vmem:[#allocation12] sm:$0xff]
          %v350 = vld [vmem:[#allocation12 + $0x8] sm:$0xff]
          %v351 = vld [vmem:[#allocation12 + $0x10] sm:$0xff]
          %v352 = vld [vmem:[#allocation12 + $0x18] sm:$0xff]
          %v353 = vld [vmem:[%s280] sm:$0xff]
          %v354 = vld [vmem:[%s280 + $0x8] sm:$0xff]
          %v355 = vld [vmem:[%s280 + $0x10] sm:$0xff]
          %v356 = vld [vmem:[%s280 + $0x18] sm:$0xff]
          %v357 = vld [vmem:[%s290] sm:$0xff]
          %v358 = vld [vmem:[%s290 + $0x8] sm:$0xff]
          %v359 = vld [vmem:[%s290 + $0x10] sm:$0xff]
          %v360 = vld [vmem:[%s290 + $0x18] sm:$0xff]
          %v361 = vld [vmem:[%s290 + $0x20] sm:$0xff]
          %v362 = vld [vmem:[%s290 + $0x28] sm:$0xff]
          %v363 = vld [vmem:[%s290 + $0x30] sm:$0xff]
          %v364 = vld [vmem:[%s290 + $0x38] sm:$0xff]
          %v365 = vld [vmem:[%s290 + $0x40] sm:$0xff]
          %v366 = vld [vmem:[%s290 + $0x48] sm:$0xff]
          %v367 = vld [vmem:[%s290 + $0x50] sm:$0xff]
          %v368 = vld [vmem:[%s290 + $0x58] sm:$0xff]
          %v369 = vld [vmem:[%s290 + $0x60] sm:$0xff]
          %v370 = vld [vmem:[%s290 + $0x68] sm:$0xff]
          %v371 = vld [vmem:[%s290 + $0x70] sm:$0xff]
          %v372 = vld [vmem:[%s290 + $0x78] sm:$0xff]
          %373 = vmatpush.msra.mxu0 %v372
          %374 = vmatpush.msra.mxu0 %v371
          %375 = vmatpush.msra.mxu0 %v370
          %376 = vmatpush.msra.mxu0 %v369
          %377 = vmatpush.msra.mxu0 %v368
          %378 = vmatpush.msra.mxu0 %v367
          %379 = vmatpush.msra.mxu0 %v366
          %380 = vmatpush.msra.mxu0 %v365
          %381 = vmatpush.msra.mxu0 %v364
          %382 = vmatpush.msra.mxu0 %v363
          %383 = vmatpush.msra.mxu0 %v362
          %384 = vmatpush.msra.mxu0 %v361
          %385 = vmatpush.msra.mxu0 %v360
          %386 = vmatpush.msra.mxu0 %v359
          %387 = vmatpush.msra.mxu0 %v358
          %388 = vmatpush.msra.mxu0 %v357
          %389 = vmatmul.f32.gmra.mxu0 %v353
          %v390 = vpop.f32.mrf.mxu0
          %v391 = vadd.f32 0.0, %v390
          %392 = vmatmul.f32.gmra.mxu0 %v354
          %v393 = vpop.f32.mrf.mxu0
          %v394 = vadd.f32 0.0, %v393
          %395 = vmatmul.f32.gmra.mxu0 %v355
          %v396 = vpop.f32.mrf.mxu0
          %v397 = vadd.f32 0.0, %v396
          %398 = vmatmul.f32.gmra.mxu0 %v356
          %v399 = vpop.f32.mrf.mxu0
          %v400 = vadd.f32 0.0, %v399
          %401 = vdwg.mxu0
          %v402 = vadd.f32 %v349, %v391
          %v403 = vadd.f32 %v350, %v394
          %v404 = vadd.f32 %v351, %v397
          %v405 = vadd.f32 %v352, %v400
          %406 = vst [vmem:[#allocation12] sm:$0xff] %v402
          %407 = vst [vmem:[#allocation12 + $0x8] sm:$0xff] %v403
          %408 = vst [vmem:[#allocation12 + $0x10] sm:$0xff] %v404
          %409 = vst [vmem:[#allocation12 + $0x18] sm:$0xff] %v405
        $region52: #{tpu_custom_call.1} parent=31 // pred_fallthru
          _
        // Predicated region
        $region53: #{tpu_custom_call.1} parent=31 // pred_check
          %p410 = pneg %p175
        $region54: #{tpu_custom_call.1} parent=31 // pred_check_branch
          %412 = sbr.rel (%p410) target = $region56
        $region55: #{tpu_custom_call.1} parent=31 // pred_region
          %s413 = smul.u32 4, %s47
          %415 = vsyncadd [#allocation8], 0
          %s416 = smul.addr %s413, 8
          %s417 = scalar_lea.hbm %s6, %s416
          %s418 = sshll.u32 [#allocation12], 4
          %s419 = int_to_ptr.vmem [resolvable:$true] %s418
          %s420 = sshll.u32 %s417, 4
          %s421 = int_to_ptr.hbm [resolvable:$true] %s420
          %426 = dma.vmem_to_hbm [thread:$0]  %s419, 512, %s421, [#allocation8], 128, 128, 8
        $region56: #{tpu_custom_call.1} parent=31 // pred_fallthru
          _
        // Predicated region
        $region57: #{tpu_custom_call.1} parent=31 // pred_check
          %p427 = pneg %p175
        $region58: #{tpu_custom_call.1} parent=31 // pred_check_branch
          %429 = sbr.rel (%p427) target = $region60
        $region59: #{tpu_custom_call.1} parent=31 // pred_region
          %431 = dma.done [#allocation8], 512
        $region60: #{tpu_custom_call.1} parent=31 // pred_fallthru
          _
      $region32: #{tpu_custom_call.1} parent=5 // pred_fallthru
        _
      %p432 = scmp.le.s32.totalorder 2, %s37
      // Predicated region
      $region61: #{tpu_custom_call.1} parent=5 // pred_check
        %p433 = pneg %p432
      $region62: #{tpu_custom_call.1} parent=5 // pred_check_branch
        %435 = sbr.rel (%p433) target = $region64
      $region63: #{tpu_custom_call.1} parent=5 // pred_region
        %s436 = ssub.s32 %s37, 2
      $region64: #{tpu_custom_call.1} parent=5 // pred_fallthru
        _
    $region6: #{tpu_custom_call.1} parent=1 // loop_footer
      %s41 = sadd.s32 1, %s37
    $region7: #{tpu_custom_call.1} parent=1 // loop_footer_branch
      %36 = sbr.rel target = $region3
    $region8: #{tpu_custom_call.1} parent=1 // loop_exit
      _
    %437 = vsyncpa [#allocation7], 1
    %s438 = scalar_lea.sflag [#allocation7], 1
    %439 = vsyncpa %s438, 1
    %440 = vsyncpa [#allocation10], 1
    %s441 = scalar_lea.sflag [#allocation10], 1
    %442 = vsyncpa %s441, 1
    %443 = vsyncpa [#allocation8], 1
    %s444 = scalar_lea.sflag [#allocation8], 1
    %445 = vsyncpa %s444, 1

</llo_original>
